<compile_context>
chip_gen: v5e
topology: v5e:2x2
jax: 0.10.0
libtpu: 0.0.40
codegen_flags: <defaults>
</compile_context>

<pallas_src>
import jax
import jax.numpy as jnp
from jax import lax
from jax.experimental import pallas as pl
from jax.experimental.pallas import tpu as pltpu


def _tpu_limits():
    """Generation-aware VMEM capacity and MXU row cap (conservative fallbacks)."""
    vmem_capacity = 64 * 1024 * 1024          # v7x has the smallest physical VMEM
    try:
        vmem_capacity = int(pltpu.get_tpu_info().vmem_capacity_bytes)
    except Exception:
        pass
    mxu_rows = 128                            # v2..v5e MXU M dimension
    try:
        kind = jax.devices()[0].device_kind.lower()
        if "v6" in kind or "v7" in kind:
            mxu_rows = 256
    except Exception:
        pass
    return vmem_capacity, mxu_rows


def _pick_batch_block(B, c_in, c_out, hw, kh, kw, vmem_budget_bytes, mxu_rows):
    """Largest divisor of B (number of images N*T) such that
      * the per-step working set (double-buffered x/out, double-buffered
        block-diagonal bf16 weight (~b^2), bf16 im2col scratch, masks, bias)
        fits the generation-aware VMEM budget,
      * b*c_out does not exceed the MXU M dimension (beyond that extra images
        only add zero-MACs and weight bytes),
      * block sublane dims are multiples of 8 (or the full array extent).
    No forced >=2-step split and no hard cap: on single-TC v5e/v6e extra grid
    steps are pure per-step overhead, so at the tested shape b_blk == B."""
    n_taps_pad = -(-(kh * kw) // 8) * 8

    def block_bytes(b):
        k = kh * kw * b * c_in
        return (2 * b * c_in * hw * 4          # input block, f32, double buffered
                + 2 * b * c_out * hw * 4       # output block, f32, double buffered
                + 2 * b * c_out * k * 2        # block-diag weight, bf16, double buffered
                + k * hw * 2                   # im2col scratch P, bf16 (single)
                + 2 * n_taps_pad * hw * 4      # boundary masks, f32
                + 2 * b * c_out * 4)           # bias column, f32

    def aligned(b):
        return b == B or ((b * c_in) % 8 == 0 and (b * c_out) % 8 == 0)

    best = None
    for d in range(1, B + 1):
        if B % d:
            continue
        if not aligned(d):
            continue
        if d * c_out > mxu_rows:
            continue
        if block_bytes(d) > vmem_budget_bytes:
            continue
        best = d
    if best is None:
        # Fall back to the smallest legally-tileable divisor (minimum VMEM).
        best = next(d for d in range(1, B + 1) if B % d == 0 and aligned(d))
    return best


def _make_conv_kernel(H, W, KH, KW):
    """Builds the per-block kernel; static shapes captured by closure."""
    pad_h, pad_w = KH // 2, KW // 2
    hw = H * W

    def kernel(x_ref, w_ref, mask_ref, bias_ref, o_ref, p_ref):
        # x_ref:    (b_blk*C_in , H*W)              f32, rows ordered (b, ci)
        # w_ref:    (b_blk*C_out, KH*KW*b_blk*C_in) bf16 block-diagonal taps
        # mask_ref: (n_taps_pad , H*W)              f32 {0,1} boundary masks
        # bias_ref: (b_blk*C_out, 1)                f32
        # o_ref:    (b_blk*C_out, H*W)              f32
        # p_ref:    (KH*KW*b_blk*C_in, H*W)         bf16 scratch im2col matrix
        rows = x_ref.shape[0]
        x = x_ref[...]

        tap = 0
        for kh in range(KH):
            dh = kh - pad_h
            for kw in range(KW):
                dw = kw - pad_w
                s0 = dh * W + dw
                # Want out[i] = x[i + s0] (cyclic roll); wrapped / out-of-plane
                # lanes are zeroed by the precomputed (1, hw) mask == 'same'
                # padding semantics.
                xs = x if s0 == 0 else pltpu.roll(x, shift=(-s0) % hw, axis=1)
                if not (dh == 0 and dw == 0):
                    # Lane-only mask broadcast over rows (f32 VPU; v5e has no
                    # bf16 VALU, so stay f32 until the very last cast).
                    xs = xs * mask_ref[tap:tap + 1, :]
                # Write the tap straight into its row-slab of the scratch P:
                # bounds the live vreg set to one tap, no concat, bf16 halves
                # the scratch footprint and feeds the MXU natively.
                p_ref[pl.ds(tap * rows, rows), :] = xs.astype(p_ref.dtype)
                tap += 1

        # One fused MXU matmul (bf16 x bf16 -> f32 accumulate); the bias
        # broadcast-add epilogue is a few VALU ops hidden under the MXU.
        acc = jnp.dot(w_ref[...], p_ref[...], preferred_element_type=jnp.float32)
        o_ref[...] = (acc + bias_ref[...]).astype(o_ref.dtype)

    return kernel


def sequence_wise_2d(x, w_oihw, bias):
    """SequenceWise2d(nn.Conv2d(C_in, C_out, (KH, KW), stride=1,
    padding=(KH//2, KW//2))) forward.

    x:      (N, T, C_in, H, W) float32
    w_oihw: (C_out, C_in, KH, KW)
    bias:   (C_out,)
    returns (N, T, C_out, H, W) float32
    """
    n, t, c_in, h, w = x.shape
    c_out, c_in_w, kh, kw = w_oihw.shape
    assert c_in_w == c_in
    # The roll+mask 'same'-padding trick is only valid for stride=1 and
    # padding=(KH//2, KW//2) with odd kernels -- fail loudly otherwise.
    assert kh % 2 == 1 and kw % 2 == 1, "only odd stride-1 'same' kernels supported"

    B = n * t
    hw = h * w

    vmem_capacity, mxu_rows = _tpu_limits()
    vmem_limit = min(int(vmem_capacity * 3 // 4), 96 * 1024 * 1024)
    b_blk = _pick_batch_block(B, c_in, c_out, hw, kh, kw,
                              vmem_budget_bytes=vmem_limit - (4 << 20),
                              mxu_rows=mxu_rows)
    n_blocks = B // b_blk

    # Free flattening (no transpose, no pad): rows ordered (n, t, c_in).
    x2d = x.reshape(B * c_in, hw)

    # Pre-pack the tap weights once (host side, bf16 for the MXU):
    #   row = (b, c_out), column = (tap, b', c_in); block-diagonal over the
    #   b_blk images of a block.
    w_taps = jnp.transpose(w_oihw, (2, 3, 0, 1)).reshape(kh * kw, c_out, c_in)
    eye = jnp.eye(b_blk, dtype=w_oihw.dtype)
    wblk = jnp.einsum('toc,bB->botBc', w_taps, eye)
    wblk = wblk.reshape(b_blk * c_out, kh * kw * b_blk * c_in)
    wblk = wblk.astype(jnp.bfloat16)
    k_dim = wblk.shape[1]

    # Bias as an explicit (rows_out, 1) column -> broadcast add epilogue.
    bias2d = jnp.tile(bias, b_blk).reshape(b_blk * c_out, 1).astype(jnp.float32)

    # Boundary masks depend only on lane position (not row, not grid step):
    # computed once on the host at (n_taps, hw), padded to a multiple of 8
    # sublanes.  This removes the per-tap (rows, hw) iota/compare chains.
    pad_h, pad_w = kh // 2, kw // 2
    pos = jnp.arange(hw, dtype=jnp.int32)
    hh, ww = pos // w, pos % w
    mask_rows = []
    for kh_i in range(kh):
        dh = kh_i - pad_h
        for kw_i in range(kw):
            dw = kw_i - pad_w
            valid = ((hh + dh >= 0) & (hh + dh < h) &
                     (ww + dw >= 0) & (ww + dw < w))
            mask_rows.append(valid.astype(jnp.float32))
    masks = jnp.stack(mask_rows, axis=0)
    n_taps_pad = -(-masks.shape[0] // 8) * 8
    if n_taps_pad != masks.shape[0]:
        masks = jnp.concatenate(
            [masks, jnp.ones((n_taps_pad - masks.shape[0], hw), jnp.float32)],
            axis=0)

    kernel = _make_conv_kernel(h, w, kh, kw)

    cost = pl.CostEstimate(
        flops=2 * B * c_out * c_in * kh * kw * hw,
        transcendentals=0,
        bytes_accessed=(B * c_in * hw * 4 + B * c_out * hw * 4
                        + n_blocks * b_blk * c_out * k_dim * 2
                        + n_taps_pad * hw * 4 + b_blk * c_out * 4),
    )

    y2d = pl.pallas_call(
        kernel,
        out_shape=jax.ShapeDtypeStruct((B * c_out, hw), x.dtype),
        grid_spec=pltpu.PrefetchScalarGridSpec(
            num_scalar_prefetch=0,
            grid=(n_blocks,),
            in_specs=[
                pl.BlockSpec((b_blk * c_in, hw), lambda i: (i, 0)),
                # TODO(synk): single-buffer this constant-index weight block
                # (pipeline_mode=pl.Buffered(1)) for large b_blk on v7x; at the
                # shapes here it is tiny and never re-DMAs.
                pl.BlockSpec((b_blk * c_out, k_dim), lambda i: (0, 0)),
                pl.BlockSpec((n_taps_pad, hw), lambda i: (0, 0)),
                pl.BlockSpec((b_blk * c_out, 1), lambda i: (0, 0)),
            ],
            out_specs=pl.BlockSpec((b_blk * c_out, hw), lambda i: (i, 0)),
            scratch_shapes=[
                pltpu.VMEM((kh * kw * b_blk * c_in, hw), jnp.bfloat16),
            ],
        ),
        # TODO(synk): on v7x, switch the batch axis to pltpu.CORE_PARALLEL with
        # >=2 blocks to shard across both TensorCores; plain "parallel" is a
        # codegen no-op and a single big step is best on single-TC v5e/v6e.
        compiler_params=pltpu.CompilerParams(
            dimension_semantics=("parallel",),
            vmem_limit_bytes=vmem_limit),
        cost_estimate=cost,
    )(x2d, wblk, masks, bias2d)

    # Free reshape back: rows ordered (n, t, c_out).
    return y2d.reshape(n, t, c_out, h, w)


if __name__ == "__main__":
    # SequenceWise2d(nn.Conv2d(4, 8, 3, stride=1, padding=1)) at small shapes:
    # N=2, T=4, C_in=4, H=W=16 -> N*T = 8 images per forward.
    N, T, C_IN, H, W = 2, 4, 4, 16, 16
    C_OUT, KH, KW = 8, 3, 3

    key = jax.random.PRNGKey(0)
    kx, kwt, kb = jax.random.split(key, 3)
    x = jax.random.normal(kx, (N, T, C_IN, H, W), dtype=jnp.float32)
    # Deterministic Conv2d-like init (uniform in +/- 1/sqrt(fan_in)).
    fan_in = C_IN * KH * KW
    bound = 1.0 / (fan_in ** 0.5)
    w_oihw = jax.random.uniform(kwt, (C_OUT, C_IN, KH, KW),
                                minval=-bound, maxval=bound, dtype=jnp.float32)
    bias = jax.random.uniform(kb, (C_OUT,), minval=-bound, maxval=bound,
                              dtype=jnp.float32)

    out = sequence_wise_2d(x, w_oihw, bias)
    out = jax.block_until_ready(out)
    assert out.shape == (N, T, C_OUT, H, W), out.shape

    def conv_ref(x5d, wt, b):
        xf = x5d.reshape(N * T, C_IN, H, W)
        y = lax.conv_general_dilated(
            xf, wt, window_strides=(1, 1), padding="SAME",
            dimension_numbers=("NCHW", "OIHW", "NCHW"),
            precision=lax.Precision.HIGHEST)
        return (y + b[None, :, None, None]).reshape(N, T, C_OUT, H, W)

    # Tight check: reference fed the same bf16-quantized inputs the kernel
    # feeds the MXU (f32 accumulation on both sides) -> only accumulation
    # order differs.
    x_q = x.astype(jnp.bfloat16).astype(jnp.float32)
    w_q = w_oihw.astype(jnp.bfloat16).astype(jnp.float32)
    ref_q = conv_ref(x_q, w_q, bias)
    assert jnp.allclose(out, ref_q, atol=1e-3, rtol=1e-3), \
        "mismatch vs bf16-quantized reference"

    # Loose sanity check against the full-f32 reference (bf16 input rounding).
    ref = conv_ref(x, w_oihw, bias)
    assert jnp.allclose(out, ref, atol=3e-2, rtol=3e-2), "mismatch vs f32 reference"

    print("KERNEL_OK")
</pallas_src>

<mosaic_0001>
module attributes {stable_mosaic.version = 11 : i64} {
  func.func @kernel(%arg0: i32, %arg1: memref<32x256xf32, #tpu.memory_space<vmem>>, %arg2: memref<64x288xbf16, #tpu.memory_space<vmem>>, %arg3: memref<16x256xf32, #tpu.memory_space<vmem>>, %arg4: memref<64x1xf32, #tpu.memory_space<vmem>>, %arg5: memref<64x256xf32, #tpu.memory_space<vmem>>, %arg6: memref<288x256xbf16, #tpu.memory_space<vmem>>) attributes {dimension_semantics = [#tpu.dimension_semantics<parallel>], iteration_bounds = array<i64: 1>, scalar_prefetch = 0 : i64, scratch_operands = 1 : i64, tpu.core_type = #tpu.core_type<tc>, window_params = [{transform_indices = @transform_0, window_bounds = array<i64: 32, 256>}, {pipeline_mode = #tpu.pipeline_mode<synchronous>, transform_indices = @transform_1, window_bounds = array<i64: 64, 288>}, {pipeline_mode = #tpu.pipeline_mode<synchronous>, transform_indices = @transform_2, window_bounds = array<i64: 16, 256>}, {pipeline_mode = #tpu.pipeline_mode<synchronous>, transform_indices = @transform_3, window_bounds = array<i64: 64, 1>}, {transform_indices = @transform_4, window_bounds = array<i64: 64, 256>}]} {
    %c0 = arith.constant 0 : index
    %c0_0 = arith.constant 0 : index
    %0 = vector.load %arg1[%c0, %c0_0] : memref<32x256xf32, #tpu.memory_space<vmem>>, vector<32x256xf32>
    %c17_i32 = arith.constant 17 : i32
    %1 = tpu.dynamic_rotate %0 by %c17_i32 dim 1 : vector<32x256xf32>, i32 -> vector<32x256xf32>
    %c0_1 = arith.constant 0 : index
    %c0_2 = arith.constant 0 : index
    %2 = vector.load %arg3[%c0_1, %c0_2] : memref<16x256xf32, #tpu.memory_space<vmem>>, vector<1x256xf32>
    %3 = vector.broadcast %2 : vector<1x256xf32> to vector<32x256xf32>
    %4 = arith.mulf %1, %3 : vector<32x256xf32>
    %5 = arith.truncf %4 : vector<32x256xf32> to vector<32x256xbf16>
    %c0_3 = arith.constant 0 : index
    %c0_4 = arith.constant 0 : index
    %6 = vector.load %arg6[%c0_3, %c0_4] : memref<288x256xbf16, #tpu.memory_space<vmem>>, vector<32x256xbf16>
    tpu.vector_store %arg6[%c0_3, %c0_4], %5 {strides = array<i32>} : memref<288x256xbf16, #tpu.memory_space<vmem>>, vector<32x256xbf16>,
    %c16_i32 = arith.constant 16 : i32
    %7 = tpu.dynamic_rotate %0 by %c16_i32 dim 1 : vector<32x256xf32>, i32 -> vector<32x256xf32>
    %c1 = arith.constant 1 : index
    %c0_5 = arith.constant 0 : index
    %8 = vector.load %arg3[%c1, %c0_5] : memref<16x256xf32, #tpu.memory_space<vmem>>, vector<1x256xf32>
    %9 = vector.broadcast %8 : vector<1x256xf32> to vector<32x256xf32>
    %10 = arith.mulf %7, %9 : vector<32x256xf32>
    %11 = arith.truncf %10 : vector<32x256xf32> to vector<32x256xbf16>
    %c32 = arith.constant 32 : index
    %c0_6 = arith.constant 0 : index
    %12 = vector.load %arg6[%c32, %c0_6] : memref<288x256xbf16, #tpu.memory_space<vmem>>, vector<32x256xbf16>
    tpu.vector_store %arg6[%c32, %c0_6], %11 {strides = array<i32>} : memref<288x256xbf16, #tpu.memory_space<vmem>>, vector<32x256xbf16>,
    %c15_i32 = arith.constant 15 : i32
    %13 = tpu.dynamic_rotate %0 by %c15_i32 dim 1 : vector<32x256xf32>, i32 -> vector<32x256xf32>
    %c2 = arith.constant 2 : index
    %c0_7 = arith.constant 0 : index
    %14 = vector.load %arg3[%c2, %c0_7] : memref<16x256xf32, #tpu.memory_space<vmem>>, vector<1x256xf32>
    %15 = vector.broadcast %14 : vector<1x256xf32> to vector<32x256xf32>
    %16 = arith.mulf %13, %15 : vector<32x256xf32>
    %17 = arith.truncf %16 : vector<32x256xf32> to vector<32x256xbf16>
    %c64 = arith.constant 64 : index
    %c0_8 = arith.constant 0 : index
    %18 = vector.load %arg6[%c64, %c0_8] : memref<288x256xbf16, #tpu.memory_space<vmem>>, vector<32x256xbf16>
    tpu.vector_store %arg6[%c64, %c0_8], %17 {strides = array<i32>} : memref<288x256xbf16, #tpu.memory_space<vmem>>, vector<32x256xbf16>,
    %c1_i32 = arith.constant 1 : i32
    %19 = tpu.dynamic_rotate %0 by %c1_i32 dim 1 : vector<32x256xf32>, i32 -> vector<32x256xf32>
    %c3 = arith.constant 3 : index
    %c0_9 = arith.constant 0 : index
    %20 = vector.load %arg3[%c3, %c0_9] : memref<16x256xf32, #tpu.memory_space<vmem>>, vector<1x256xf32>
    %21 = vector.broadcast %20 : vector<1x256xf32> to vector<32x256xf32>
    %22 = arith.mulf %19, %21 : vector<32x256xf32>
    %23 = arith.truncf %22 : vector<32x256xf32> to vector<32x256xbf16>
    %c96 = arith.constant 96 : index
    %c0_10 = arith.constant 0 : index
    %24 = vector.load %arg6[%c96, %c0_10] : memref<288x256xbf16, #tpu.memory_space<vmem>>, vector<32x256xbf16>
    tpu.vector_store %arg6[%c96, %c0_10], %23 {strides = array<i32>} : memref<288x256xbf16, #tpu.memory_space<vmem>>, vector<32x256xbf16>,
    %25 = arith.truncf %0 : vector<32x256xf32> to vector<32x256xbf16>
    %c128 = arith.constant 128 : index
    %c0_11 = arith.constant 0 : index
    %26 = vector.load %arg6[%c128, %c0_11] : memref<288x256xbf16, #tpu.memory_space<vmem>>, vector<32x256xbf16>
    tpu.vector_store %arg6[%c128, %c0_11], %25 {strides = array<i32>} : memref<288x256xbf16, #tpu.memory_space<vmem>>, vector<32x256xbf16>,
    %c255_i32 = arith.constant 255 : i32
    %27 = tpu.dynamic_rotate %0 by %c255_i32 dim 1 : vector<32x256xf32>, i32 -> vector<32x256xf32>
    %c5 = arith.constant 5 : index
    %c0_12 = arith.constant 0 : index
    %28 = vector.load %arg3[%c5, %c0_12] : memref<16x256xf32, #tpu.memory_space<vmem>>, vector<1x256xf32>
    %29 = vector.broadcast %28 : vector<1x256xf32> to vector<32x256xf32>
    %30 = arith.mulf %27, %29 : vector<32x256xf32>
    %31 = arith.truncf %30 : vector<32x256xf32> to vector<32x256xbf16>
    %c160 = arith.constant 160 : index
    %c0_13 = arith.constant 0 : index
    %32 = vector.load %arg6[%c160, %c0_13] : memref<288x256xbf16, #tpu.memory_space<vmem>>, vector<32x256xbf16>
    tpu.vector_store %arg6[%c160, %c0_13], %31 {strides = array<i32>} : memref<288x256xbf16, #tpu.memory_space<vmem>>, vector<32x256xbf16>,
    %c241_i32 = arith.constant 241 : i32
    %33 = tpu.dynamic_rotate %0 by %c241_i32 dim 1 : vector<32x256xf32>, i32 -> vector<32x256xf32>
    %c6 = arith.constant 6 : index
    %c0_14 = arith.constant 0 : index
    %34 = vector.load %arg3[%c6, %c0_14] : memref<16x256xf32, #tpu.memory_space<vmem>>, vector<1x256xf32>
    %35 = vector.broadcast %34 : vector<1x256xf32> to vector<32x256xf32>
    %36 = arith.mulf %33, %35 : vector<32x256xf32>
    %37 = arith.truncf %36 : vector<32x256xf32> to vector<32x256xbf16>
    %c192 = arith.constant 192 : index
    %c0_15 = arith.constant 0 : index
    %38 = vector.load %arg6[%c192, %c0_15] : memref<288x256xbf16, #tpu.memory_space<vmem>>, vector<32x256xbf16>
    tpu.vector_store %arg6[%c192, %c0_15], %37 {strides = array<i32>} : memref<288x256xbf16, #tpu.memory_space<vmem>>, vector<32x256xbf16>,
    %c240_i32 = arith.constant 240 : i32
    %39 = tpu.dynamic_rotate %0 by %c240_i32 dim 1 : vector<32x256xf32>, i32 -> vector<32x256xf32>
    %c7 = arith.constant 7 : index
    %c0_16 = arith.constant 0 : index
    %40 = vector.load %arg3[%c7, %c0_16] : memref<16x256xf32, #tpu.memory_space<vmem>>, vector<1x256xf32>
    %41 = vector.broadcast %40 : vector<1x256xf32> to vector<32x256xf32>
    %42 = arith.mulf %39, %41 : vector<32x256xf32>
    %43 = arith.truncf %42 : vector<32x256xf32> to vector<32x256xbf16>
    %c224 = arith.constant 224 : index
    %c0_17 = arith.constant 0 : index
    %44 = vector.load %arg6[%c224, %c0_17] : memref<288x256xbf16, #tpu.memory_space<vmem>>, vector<32x256xbf16>
    tpu.vector_store %arg6[%c224, %c0_17], %43 {strides = array<i32>} : memref<288x256xbf16, #tpu.memory_space<vmem>>, vector<32x256xbf16>,
    %c239_i32 = arith.constant 239 : i32
    %45 = tpu.dynamic_rotate %0 by %c239_i32 dim 1 : vector<32x256xf32>, i32 -> vector<32x256xf32>
    %c8 = arith.constant 8 : index
    %c0_18 = arith.constant 0 : index
    %46 = vector.load %arg3[%c8, %c0_18] : memref<16x256xf32, #tpu.memory_space<vmem>>, vector<1x256xf32>
    %47 = vector.broadcast %46 : vector<1x256xf32> to vector<32x256xf32>
    %48 = arith.mulf %45, %47 : vector<32x256xf32>
    %49 = arith.truncf %48 : vector<32x256xf32> to vector<32x256xbf16>
    %c256 = arith.constant 256 : index
    %c0_19 = arith.constant 0 : index
    %50 = vector.load %arg6[%c256, %c0_19] : memref<288x256xbf16, #tpu.memory_space<vmem>>, vector<32x256xbf16>
    tpu.vector_store %arg6[%c256, %c0_19], %49 {strides = array<i32>} : memref<288x256xbf16, #tpu.memory_space<vmem>>, vector<32x256xbf16>,
    %c0_20 = arith.constant 0 : index
    %c0_21 = arith.constant 0 : index
    %51 = vector.load %arg2[%c0_20, %c0_21] : memref<64x288xbf16, #tpu.memory_space<vmem>>, vector<64x288xbf16>
    %c0_22 = arith.constant 0 : index
    %c0_23 = arith.constant 0 : index
    %52 = vector.load %arg6[%c0_22, %c0_23] : memref<288x256xbf16, #tpu.memory_space<vmem>>, vector<288x256xbf16>
    %cst = arith.constant dense<0.000000e+00> : vector<64x256xf32>
    %53 = tpu.matmul %51, %52, %cst {dimension_numbers = #tpu.dot_dimension_numbers<[1], [0], [0], [1], [0, 0, 1, 1], [], []>} : vector<64x288xbf16>, vector<288x256xbf16>, vector<64x256xf32> -> vector<64x256xf32>
    %c0_24 = arith.constant 0 : index
    %c0_25 = arith.constant 0 : index
    %54 = vector.load %arg4[%c0_24, %c0_25] : memref<64x1xf32, #tpu.memory_space<vmem>>, vector<64x1xf32>
    %55 = vector.broadcast %54 : vector<64x1xf32> to vector<64x256xf32>
    %56 = arith.addf %53, %55 : vector<64x256xf32>
    %c0_26 = arith.constant 0 : index
    %c0_27 = arith.constant 0 : index
    %57 = vector.load %arg5[%c0_26, %c0_27] : memref<64x256xf32, #tpu.memory_space<vmem>>, vector<64x256xf32>
    tpu.vector_store %arg5[%c0_26, %c0_27], %56 {strides = array<i32>} : memref<64x256xf32, #tpu.memory_space<vmem>>, vector<64x256xf32>,
    return
  }
  func.func @transform_0(%arg0: i32) -> (i32, i32) {
    %c0_i32 = arith.constant 0 : i32
    %c0_i32_0 = arith.constant 0 : i32
    return %arg0, %c0_i32 : i32, i32
  }
  func.func @transform_1(%arg0: i32) -> (i32, i32) {
    %c0_i32 = arith.constant 0 : i32
    %c0_i32_0 = arith.constant 0 : i32
    %c0_i32_1 = arith.constant 0 : i32
    return %c0_i32, %c0_i32_0 : i32, i32
  }
  func.func @transform_2(%arg0: i32) -> (i32, i32) {
    %c0_i32 = arith.constant 0 : i32
    %c0_i32_0 = arith.constant 0 : i32
    %c0_i32_1 = arith.constant 0 : i32
    return %c0_i32, %c0_i32_0 : i32, i32
  }
  func.func @transform_3(%arg0: i32) -> (i32, i32) {
    %c0_i32 = arith.constant 0 : i32
    %c0_i32_0 = arith.constant 0 : i32
    %c0_i32_1 = arith.constant 0 : i32
    return %c0_i32, %c0_i32_0 : i32, i32
  }
  func.func @transform_4(%arg0: i32) -> (i32, i32) {
    %c0_i32 = arith.constant 0 : i32
    %c0_i32_0 = arith.constant 0 : i32
    return %arg0, %c0_i32 : i32, i32
  }
}

</mosaic_0001>

<llo_original>
// kernel: tpu_custom_call.1
$region0: #{tpu_custom_call.1}
  #allocation0 [shape = 'u32[]', space=smem, size = 0x4, offset = 0x4, fixed_abs, tag = 'smem constant byte address 0x4 - core index']
  #allocation1 [shape = 'u32[72,128]{1,0:T(1,128)}', space=vmem, size = 0x9000, scoped, tag = 'internal scratch']
  #allocation2 [shape = 'bf16[288,256]{1,0:T(8,128)(2,1)}', space=vmem, size = 0x24000, scoped, tag = 'scratch operand']
  %s0 = inlined_call_operand.vmem [shape: f32[32,256], index: 0, kind: input, shape index: {}]
  %s1 = inlined_call_operand.hbm [shape: bf16[64,288], index: 1, kind: input, shape index: {}]
  %s2 = inlined_call_operand.hbm [shape: f32[16,256], index: 2, kind: input, shape index: {}]
  %s3 = inlined_call_operand.vmem [shape: f32[64,1], index: 3, kind: input, shape index: {}]
  %s4 = inlined_call_operand.hbm [shape: f32[64,256], index: 4, kind: output, shape index: {}]
  %s5 = sld [smem:[#allocation0]]
  $region34: #{tpu_custom_call.1} parent=0
    _
  %s7 = ssub.s32 1, %s5
  %s8 = scalar_select 0, %s7, %s5
  $region1: #{tpu_custom_call.1} parent=0
    #allocation3 [shape = 'u8[49152]{0}', space=vmem, size = 0xc000, scoped, tag = 'input window, operand 1, single buffered']
    #allocation4 [shape = 's32[1]{0}', space=sflag, size = 0x4, scoped, tag = 'scoped memory for tpu_custom_call.1']
    #allocation5 [shape = 's32[1]{0}', space=sflag, size = 0x4, scoped, tag = 'scoped memory for tpu_custom_call.1']
    #allocation6 [shape = 'u8[16384]{0}', space=vmem, size = 0x4000, scoped, tag = 'input window, operand 2, single buffered']
    #allocation7 [shape = 's32[1]{0}', space=sflag, size = 0x4, scoped, tag = 'scoped memory for tpu_custom_call.1']
    #allocation8 [shape = 'u8[65536]{0}', space=vmem, size = 0x10000, scoped, tag = 'output window, operand 0, single buffered']
    %9 = vsyncpa [#allocation4], 0
    %10 = vsyncpa [#allocation7], 0
    %11 = vsyncpa [#allocation5], 0
    // Predicated region
    $region2: #{tpu_custom_call.1} parent=1 // pred_check
      _
    $region3: #{tpu_custom_call.1} parent=1 // pred_check_branch
      %13 = sbr.rel (0) target = $region5
    $region4: #{tpu_custom_call.1} parent=1 // pred_region
      _
    $region5: #{tpu_custom_call.1} parent=1 // pred_fallthru
      _
    // Predicated region
    $region6: #{tpu_custom_call.1} parent=1 // pred_check
      _
    $region7: #{tpu_custom_call.1} parent=1 // pred_check_branch
      %15 = sbr.rel (0) target = $region9
    $region8: #{tpu_custom_call.1} parent=1 // pred_region
      %17 = vsyncadd [#allocation4], 0
      %s18 = sshll.u32 %s1, 4
      %s19 = int_to_ptr.hbm [resolvable:$true] %s18
      %s20 = sshll.u32 [#allocation3], 4
      %s21 = int_to_ptr.vmem [resolvable:$true] %s20
      %26 = dma.hbm_to_vmem [thread:$0]  %s19, 1536, %s21, [#allocation4], 192, 192, 12
    $region9: #{tpu_custom_call.1} parent=1 // pred_fallthru
      _
    // Predicated region
    $region10: #{tpu_custom_call.1} parent=1 // pred_check
      _
    $region11: #{tpu_custom_call.1} parent=1 // pred_check_branch
      %28 = sbr.rel (0) target = $region13
    $region12: #{tpu_custom_call.1} parent=1 // pred_region
      %30 = vsyncadd [#allocation7], 0
      %s31 = sshll.u32 %s2, 4
      %s32 = int_to_ptr.hbm [resolvable:$true] %s31
      %s33 = sshll.u32 [#allocation6], 4
      %s34 = int_to_ptr.vmem [resolvable:$true] %s33
      %39 = dma.hbm_to_vmem [thread:$0]  %s32, 512, %s34, [#allocation7], 256, 256, 16
    $region13: #{tpu_custom_call.1} parent=1 // pred_fallthru
      _
    // Predicated region
    $region14: #{tpu_custom_call.1} parent=1 // pred_check
      _
    $region15: #{tpu_custom_call.1} parent=1 // pred_check_branch
      %41 = sbr.rel (0) target = $region17
    $region16: #{tpu_custom_call.1} parent=1 // pred_region
      _
    $region17: #{tpu_custom_call.1} parent=1 // pred_fallthru
      _
    // Predicated region
    $region18: #{tpu_custom_call.1} parent=1 // pred_check
      _
    $region19: #{tpu_custom_call.1} parent=1 // pred_check_branch
      %43 = sbr.rel (0) target = $region21
    $region20: #{tpu_custom_call.1} parent=1 // pred_region
      %45 = dma.done [#allocation4], 1536
    $region21: #{tpu_custom_call.1} parent=1 // pred_fallthru
      _
    // Predicated region
    $region22: #{tpu_custom_call.1} parent=1 // pred_check
      _
    $region23: #{tpu_custom_call.1} parent=1 // pred_check_branch
      %47 = sbr.rel (0) target = $region25
    $region24: #{tpu_custom_call.1} parent=1 // pred_region
      %49 = dma.done [#allocation7], 512
    $region25: #{tpu_custom_call.1} parent=1 // pred_fallthru
      _
    %v51 = vld [vmem:[%s0] sm:$0xff]
    %v52 = vld [vmem:[%s0 + $0x8] sm:$0xff]
    %v53 = vld [vmem:[%s0 + $0x10] sm:$0xff]
    %v54 = vld [vmem:[%s0 + $0x18] sm:$0xff]
    %v55 = vld [vmem:[%s0 + $0x20] sm:$0xff]
    %v56 = vld [vmem:[%s0 + $0x28] sm:$0xff]
    %v57 = vld [vmem:[%s0 + $0x30] sm:$0xff]
    %v58 = vld [vmem:[%s0 + $0x38] sm:$0xff]
    %59 = vrot.lane.b32.xlu0 %v51, 17
    %v60 = vpop.permute.xlu0 %59
    %61 = vrot.lane.b32.xlu0 %v53, 17
    %v62 = vpop.permute.xlu0 %61
    %63 = vrot.lane.b32.xlu0 %v55, 17
    %v64 = vpop.permute.xlu0 %63
    %65 = vrot.lane.b32.xlu0 %v57, 17
    %v66 = vpop.permute.xlu0 %65
    %67 = vrot.lane.b32.xlu0 %v52, 17
    %v68 = vpop.permute.xlu0 %67
    %69 = vrot.lane.b32.xlu0 %v54, 17
    %v70 = vpop.permute.xlu0 %69
    %71 = vrot.lane.b32.xlu0 %v56, 17
    %v72 = vpop.permute.xlu0 %71
    %73 = vrot.lane.b32.xlu0 %v58, 17
    %v74 = vpop.permute.xlu0 %73
    %v75 = vlaneseq
    %v76 = vand.u32 %v75, 127
    %vm77 = vcmp.lt.s32.totalorder %v76, 17
    %v78 = vsel %vm77, %v60, %v68
    %v79 = vsel %vm77, %v62, %v70
    %v80 = vsel %vm77, %v64, %v72
    %v81 = vsel %vm77, %v66, %v74
    %v82 = vsel %vm77, %v68, %v60
    %v83 = vsel %vm77, %v70, %v62
    %v84 = vsel %vm77, %v72, %v64
    %v85 = vsel %vm77, %v74, %v66
    %v86 = vld [vmem:[#allocation6] ss:$8 sm:$0x3]
    %v88 = vperm.slane %v86, 0
    %v89 = vperm.slane %v86, 1
    %v92 = vmul.f32 %v82, %v88
    %v93 = vmul.f32 %v78, %v89
    %v94 = vmul.f32 %v83, %v88
    %v95 = vmul.f32 %v79, %v89
    %v96 = vmul.f32 %v84, %v88
    %v97 = vmul.f32 %v80, %v89
    %v98 = vmul.f32 %v85, %v88
    %v99 = vmul.f32 %v81, %v89
    %v100 = vpack.c.bf16 %v93, %v92
    %v101 = vpack.c.bf16 %v95, %v94
    %v102 = vpack.c.bf16 %v97, %v96
    %v103 = vpack.c.bf16 %v99, %v98
    %104 = vst [vmem:[#allocation2] sm:$0xff] %v100
    %105 = vst [vmem:[#allocation2 + $0x8] sm:$0xff] %v101
    %106 = vst [vmem:[#allocation2 + $0x10] sm:$0xff] %v102
    %107 = vst [vmem:[#allocation2 + $0x18] sm:$0xff] %v103
    %108 = vrot.lane.b32.xlu0 %v51, 16
    %v109 = vpop.permute.xlu0 %108
    %110 = vrot.lane.b32.xlu0 %v53, 16
    %v111 = vpop.permute.xlu0 %110
    %112 = vrot.lane.b32.xlu0 %v55, 16
    %v113 = vpop.permute.xlu0 %112
    %114 = vrot.lane.b32.xlu0 %v57, 16
    %v115 = vpop.permute.xlu0 %114
    %116 = vrot.lane.b32.xlu0 %v52, 16
    %v117 = vpop.permute.xlu0 %116
    %118 = vrot.lane.b32.xlu0 %v54, 16
    %v119 = vpop.permute.xlu0 %118
    %120 = vrot.lane.b32.xlu0 %v56, 16
    %v121 = vpop.permute.xlu0 %120
    %122 = vrot.lane.b32.xlu0 %v58, 16
    %v123 = vpop.permute.xlu0 %122
    %vm124 = vcmp.lt.s32.totalorder %v76, 16
    %v125 = vsel %vm124, %v109, %v117
    %v126 = vsel %vm124, %v111, %v119
    %v127 = vsel %vm124, %v113, %v121
    %v128 = vsel %vm124, %v115, %v123
    %v129 = vsel %vm124, %v117, %v109
    %v130 = vsel %vm124, %v119, %v111
    %v131 = vsel %vm124, %v121, %v113
    %v132 = vsel %vm124, %v123, %v115
    %s133 = scalar_lea.vmem [#allocation6], 1
    %v134 = vld [vmem:[%s133] ss:$8 sm:$0x3]
    %v136 = vperm.slane %v134, 0
    %v137 = vperm.slane %v134, 1
    %v140 = vmul.f32 %v129, %v136
    %v141 = vmul.f32 %v125, %v137
    %v142 = vmul.f32 %v130, %v136
    %v143 = vmul.f32 %v126, %v137
    %v144 = vmul.f32 %v131, %v136
    %v145 = vmul.f32 %v127, %v137
    %v146 = vmul.f32 %v132, %v136
    %v147 = vmul.f32 %v128, %v137
    %v148 = vpack.c.bf16 %v141, %v140
    %v149 = vpack.c.bf16 %v143, %v142
    %v150 = vpack.c.bf16 %v145, %v144
    %v151 = vpack.c.bf16 %v147, %v146
    %152 = vst [vmem:[#allocation2 + $0x20] sm:$0xff] %v148
    %153 = vst [vmem:[#allocation2 + $0x28] sm:$0xff] %v149
    %154 = vst [vmem:[#allocation2 + $0x30] sm:$0xff] %v150
    %155 = vst [vmem:[#allocation2 + $0x38] sm:$0xff] %v151
    %156 = vrot.lane.b32.xlu0 %v51, 15
    %v157 = vpop.permute.xlu0 %156
    %158 = vrot.lane.b32.xlu0 %v53, 15
    %v159 = vpop.permute.xlu0 %158
    %160 = vrot.lane.b32.xlu0 %v55, 15
    %v161 = vpop.permute.xlu0 %160
    %162 = vrot.lane.b32.xlu0 %v57, 15
    %v163 = vpop.permute.xlu0 %162
    %164 = vrot.lane.b32.xlu0 %v52, 15
    %v165 = vpop.permute.xlu0 %164
    %166 = vrot.lane.b32.xlu0 %v54, 15
    %v167 = vpop.permute.xlu0 %166
    %168 = vrot.lane.b32.xlu0 %v56, 15
    %v169 = vpop.permute.xlu0 %168
    %170 = vrot.lane.b32.xlu0 %v58, 15
    %v171 = vpop.permute.xlu0 %170
    %vm172 = vcmp.lt.s32.totalorder %v76, 15
    %v173 = vsel %vm172, %v157, %v165
    %v174 = vsel %vm172, %v159, %v167
    %v175 = vsel %vm172, %v161, %v169
    %v176 = vsel %vm172, %v163, %v171
    %v177 = vsel %vm172, %v165, %v157
    %v178 = vsel %vm172, %v167, %v159
    %v179 = vsel %vm172, %v169, %v161
    %v180 = vsel %vm172, %v171, %v163
    %s181 = scalar_lea.vmem [#allocation6], 2
    %v182 = vld [vmem:[%s181] ss:$8 sm:$0x3]
    %v184 = vperm.slane %v182, 0
    %v185 = vperm.slane %v182, 1
    %v188 = vmul.f32 %v177, %v184
    %v189 = vmul.f32 %v173, %v185
    %v190 = vmul.f32 %v178, %v184
    %v191 = vmul.f32 %v174, %v185
    %v192 = vmul.f32 %v179, %v184
    %v193 = vmul.f32 %v175, %v185
    %v194 = vmul.f32 %v180, %v184
    %v195 = vmul.f32 %v176, %v185
    %v196 = vpack.c.bf16 %v189, %v188
    %v197 = vpack.c.bf16 %v191, %v190
    %v198 = vpack.c.bf16 %v193, %v192
    %v199 = vpack.c.bf16 %v195, %v194
    %200 = vst [vmem:[#allocation2 + $0x40] sm:$0xff] %v196
    %201 = vst [vmem:[#allocation2 + $0x48] sm:$0xff] %v197
    %202 = vst [vmem:[#allocation2 + $0x50] sm:$0xff] %v198
    %203 = vst [vmem:[#allocation2 + $0x58] sm:$0xff] %v199
    %204 = vrot.lane.b32.xlu0 %v51, 1
    %v205 = vpop.permute.xlu0 %204
    %206 = vrot.lane.b32.xlu0 %v53, 1
    %v207 = vpop.permute.xlu0 %206
    %208 = vrot.lane.b32.xlu0 %v55, 1
    %v209 = vpop.permute.xlu0 %208
    %210 = vrot.lane.b32.xlu0 %v57, 1
    %v211 = vpop.permute.xlu0 %210
    %212 = vrot.lane.b32.xlu0 %v52, 1
    %v213 = vpop.permute.xlu0 %212
    %214 = vrot.lane.b32.xlu0 %v54, 1
    %v215 = vpop.permute.xlu0 %214
    %216 = vrot.lane.b32.xlu0 %v56, 1
    %v217 = vpop.permute.xlu0 %216
    %218 = vrot.lane.b32.xlu0 %v58, 1
    %v219 = vpop.permute.xlu0 %218
    %vm220 = vcmp.lt.s32.totalorder %v76, 1
    %v221 = vsel %vm220, %v205, %v213
    %v222 = vsel %vm220, %v207, %v215
    %v223 = vsel %vm220, %v209, %v217
    %v224 = vsel %vm220, %v211, %v219
    %v225 = vsel %vm220, %v213, %v205
    %v226 = vsel %vm220, %v215, %v207
    %v227 = vsel %vm220, %v217, %v209
    %v228 = vsel %vm220, %v219, %v211
    %s229 = scalar_lea.vmem [#allocation6], 3
    %v230 = vld [vmem:[%s229] ss:$8 sm:$0x3]
    %v232 = vperm.slane %v230, 0
    %v233 = vperm.slane %v230, 1
    %v236 = vmul.f32 %v225, %v232
    %v237 = vmul.f32 %v221, %v233
    %v238 = vmul.f32 %v226, %v232
    %v239 = vmul.f32 %v222, %v233
    %v240 = vmul.f32 %v227, %v232
    %v241 = vmul.f32 %v223, %v233
    %v242 = vmul.f32 %v228, %v232
    %v243 = vmul.f32 %v224, %v233
    %v244 = vpack.c.bf16 %v237, %v236
    %v245 = vpack.c.bf16 %v239, %v238
    %v246 = vpack.c.bf16 %v241, %v240
    %v247 = vpack.c.bf16 %v243, %v242
    %248 = vst [vmem:[#allocation2 + $0x60] sm:$0xff] %v244
    %249 = vst [vmem:[#allocation2 + $0x68] sm:$0xff] %v245
    %250 = vst [vmem:[#allocation2 + $0x70] sm:$0xff] %v246
    %251 = vst [vmem:[#allocation2 + $0x78] sm:$0xff] %v247
    %v252 = vpack.c.bf16 %v52, %v51
    %v253 = vpack.c.bf16 %v54, %v53
    %v254 = vpack.c.bf16 %v56, %v55
    %v255 = vpack.c.bf16 %v58, %v57
    %256 = vst [vmem:[#allocation2 + $0x80] sm:$0xff] %v252
    %257 = vst [vmem:[#allocation2 + $0x88] sm:$0xff] %v253
    %258 = vst [vmem:[#allocation2 + $0x90] sm:$0xff] %v254
    %259 = vst [vmem:[#allocation2 + $0x98] sm:$0xff] %v255
    %260 = vrot.lane.b32.xlu0 %v51, 127
    %v261 = vpop.permute.xlu0 %260
    %262 = vrot.lane.b32.xlu0 %v53, 127
    %v263 = vpop.permute.xlu0 %262
    %264 = vrot.lane.b32.xlu0 %v55, 127
    %v265 = vpop.permute.xlu0 %264
    %266 = vrot.lane.b32.xlu0 %v57, 127
    %v267 = vpop.permute.xlu0 %266
    %268 = vrot.lane.b32.xlu0 %v52, 127
    %v269 = vpop.permute.xlu0 %268
    %270 = vrot.lane.b32.xlu0 %v54, 127
    %v271 = vpop.permute.xlu0 %270
    %272 = vrot.lane.b32.xlu0 %v56, 127
    %v273 = vpop.permute.xlu0 %272
    %274 = vrot.lane.b32.xlu0 %v58, 127
    %v275 = vpop.permute.xlu0 %274
    %vm276 = vcmp.lt.s32.totalorder %v76, 127
    %v277 = vsel %vm276, %v261, %v269
    %v278 = vsel %vm276, %v263, %v271
    %v279 = vsel %vm276, %v265, %v273
    %v280 = vsel %vm276, %v267, %v275
    %v281 = vsel %vm276, %v269, %v261
    %v282 = vsel %vm276, %v271, %v263
    %v283 = vsel %vm276, %v273, %v265
    %v284 = vsel %vm276, %v275, %v267
    %s285 = scalar_lea.vmem [#allocation6], 5
    %v286 = vld [vmem:[%s285] ss:$8 sm:$0x3]
    %v288 = vperm.slane %v286, 0
    %v289 = vperm.slane %v286, 1
    %v292 = vmul.f32 %v277, %v288
    %v293 = vmul.f32 %v281, %v289
    %v294 = vmul.f32 %v278, %v288
    %v295 = vmul.f32 %v282, %v289
    %v296 = vmul.f32 %v279, %v288
    %v297 = vmul.f32 %v283, %v289
    %v298 = vmul.f32 %v280, %v288
    %v299 = vmul.f32 %v284, %v289
    %v300 = vpack.c.bf16 %v293, %v292
    %v301 = vpack.c.bf16 %v295, %v294
    %v302 = vpack.c.bf16 %v297, %v296
    %v303 = vpack.c.bf16 %v299, %v298
    %304 = vst [vmem:[#allocation2 + $0xa0] sm:$0xff] %v300
    %305 = vst [vmem:[#allocation2 + $0xa8] sm:$0xff] %v301
    %306 = vst [vmem:[#allocation2 + $0xb0] sm:$0xff] %v302
    %307 = vst [vmem:[#allocation2 + $0xb8] sm:$0xff] %v303
    %308 = vrot.lane.b32.xlu0 %v51, 113
    %v309 = vpop.permute.xlu0 %308
    %310 = vrot.lane.b32.xlu0 %v53, 113
    %v311 = vpop.permute.xlu0 %310
    %312 = vrot.lane.b32.xlu0 %v55, 113
    %v313 = vpop.permute.xlu0 %312
    %314 = vrot.lane.b32.xlu0 %v57, 113
    %v315 = vpop.permute.xlu0 %314
    %316 = vrot.lane.b32.xlu0 %v52, 113
    %v317 = vpop.permute.xlu0 %316
    %318 = vrot.lane.b32.xlu0 %v54, 113
    %v319 = vpop.permute.xlu0 %318
    %320 = vrot.lane.b32.xlu0 %v56, 113
    %v321 = vpop.permute.xlu0 %320
    %322 = vrot.lane.b32.xlu0 %v58, 113
    %v323 = vpop.permute.xlu0 %322
    %vm324 = vcmp.lt.s32.totalorder %v76, 113
    %v325 = vsel %vm324, %v309, %v317
    %v326 = vsel %vm324, %v311, %v319
    %v327 = vsel %vm324, %v313, %v321
    %v328 = vsel %vm324, %v315, %v323
    %v329 = vsel %vm324, %v317, %v309
    %v330 = vsel %vm324, %v319, %v311
    %v331 = vsel %vm324, %v321, %v313
    %v332 = vsel %vm324, %v323, %v315
    %s333 = scalar_lea.vmem [#allocation6], 6
    %v334 = vld [vmem:[%s333] ss:$8 sm:$0x3]
    %v336 = vperm.slane %v334, 0
    %v337 = vperm.slane %v334, 1
    %v340 = vmul.f32 %v325, %v336
    %v341 = vmul.f32 %v329, %v337
    %v342 = vmul.f32 %v326, %v336
    %v343 = vmul.f32 %v330, %v337
    %v344 = vmul.f32 %v327, %v336
    %v345 = vmul.f32 %v331, %v337
    %v346 = vmul.f32 %v328, %v336
    %v347 = vmul.f32 %v332, %v337
    %v348 = vpack.c.bf16 %v341, %v340
    %v349 = vpack.c.bf16 %v343, %v342
    %v350 = vpack.c.bf16 %v345, %v344
    %v351 = vpack.c.bf16 %v347, %v346
    %352 = vst [vmem:[#allocation2 + $0xc0] sm:$0xff] %v348
    %353 = vst [vmem:[#allocation2 + $0xc8] sm:$0xff] %v349
    %354 = vst [vmem:[#allocation2 + $0xd0] sm:$0xff] %v350
    %355 = vst [vmem:[#allocation2 + $0xd8] sm:$0xff] %v351
    %356 = vrot.lane.b32.xlu0 %v51, 112
    %v357 = vpop.permute.xlu0 %356
    %358 = vrot.lane.b32.xlu0 %v53, 112
    %v359 = vpop.permute.xlu0 %358
    %360 = vrot.lane.b32.xlu0 %v55, 112
    %v361 = vpop.permute.xlu0 %360
    %362 = vrot.lane.b32.xlu0 %v57, 112
    %v363 = vpop.permute.xlu0 %362
    %364 = vrot.lane.b32.xlu0 %v52, 112
    %v365 = vpop.permute.xlu0 %364
    %366 = vrot.lane.b32.xlu0 %v54, 112
    %v367 = vpop.permute.xlu0 %366
    %368 = vrot.lane.b32.xlu0 %v56, 112
    %v369 = vpop.permute.xlu0 %368
    %370 = vrot.lane.b32.xlu0 %v58, 112
    %v371 = vpop.permute.xlu0 %370
    %vm372 = vcmp.lt.s32.totalorder %v76, 112
    %v373 = vsel %vm372, %v357, %v365
    %v374 = vsel %vm372, %v359, %v367
    %v375 = vsel %vm372, %v361, %v369
    %v376 = vsel %vm372, %v363, %v371
    %v377 = vsel %vm372, %v365, %v357
    %v378 = vsel %vm372, %v367, %v359
    %v379 = vsel %vm372, %v369, %v361
    %v380 = vsel %vm372, %v371, %v363
    %s381 = scalar_lea.vmem [#allocation6], 7
    %v382 = vld [vmem:[%s381] ss:$8 sm:$0x3]
    %v384 = vperm.slane %v382, 0
    %v385 = vperm.slane %v382, 1
    %v388 = vmul.f32 %v373, %v384
    %v389 = vmul.f32 %v377, %v385
    %v390 = vmul.f32 %v374, %v384
    %v391 = vmul.f32 %v378, %v385
    %v392 = vmul.f32 %v375, %v384
    %v393 = vmul.f32 %v379, %v385
    %v394 = vmul.f32 %v376, %v384
    %v395 = vmul.f32 %v380, %v385
    %v396 = vpack.c.bf16 %v389, %v388
    %v397 = vpack.c.bf16 %v391, %v390
    %v398 = vpack.c.bf16 %v393, %v392
    %v399 = vpack.c.bf16 %v395, %v394
    %400 = vst [vmem:[#allocation2 + $0xe0] sm:$0xff] %v396
    %401 = vst [vmem:[#allocation2 + $0xe8] sm:$0xff] %v397
    %402 = vst [vmem:[#allocation2 + $0xf0] sm:$0xff] %v398
    %403 = vst [vmem:[#allocation2 + $0xf8] sm:$0xff] %v399
    %404 = vrot.lane.b32.xlu0 %v51, 111
    %v405 = vpop.permute.xlu0 %404
    %406 = vrot.lane.b32.xlu0 %v53, 111
    %v407 = vpop.permute.xlu0 %406
    %408 = vrot.lane.b32.xlu0 %v55, 111
    %v409 = vpop.permute.xlu0 %408
    %410 = vrot.lane.b32.xlu0 %v57, 111
    %v411 = vpop.permute.xlu0 %410
    %412 = vrot.lane.b32.xlu0 %v52, 111
    %v413 = vpop.permute.xlu0 %412
    %414 = vrot.lane.b32.xlu0 %v54, 111
    %v415 = vpop.permute.xlu0 %414
    %416 = vrot.lane.b32.xlu0 %v56, 111
    %v417 = vpop.permute.xlu0 %416
    %418 = vrot.lane.b32.xlu0 %v58, 111
    %v419 = vpop.permute.xlu0 %418
    %vm420 = vcmp.lt.s32.totalorder %v76, 111
    %v421 = vsel %vm420, %v405, %v413
    %v422 = vsel %vm420, %v407, %v415
    %v423 = vsel %vm420, %v409, %v417
    %v424 = vsel %vm420, %v411, %v419
    %v425 = vsel %vm420, %v413, %v405
    %v426 = vsel %vm420, %v415, %v407
    %v427 = vsel %vm420, %v417, %v409
    %v428 = vsel %vm420, %v419, %v411
    %s429 = scalar_lea.vmem [#allocation6], 16
    %v430 = vld [vmem:[%s429] ss:$8 sm:$0x3]
    %v432 = vperm.slane %v430, 0
    %v433 = vperm.slane %v430, 1
    %v436 = vmul.f32 %v421, %v432
    %v437 = vmul.f32 %v425, %v433
    %v438 = vmul.f32 %v422, %v432
    %v439 = vmul.f32 %v426, %v433
    %v440 = vmul.f32 %v423, %v432
    %v441 = vmul.f32 %v427, %v433
    %v442 = vmul.f32 %v424, %v432
    %v443 = vmul.f32 %v428, %v433
    %v444 = vpack.c.bf16 %v437, %v436
    %v445 = vpack.c.bf16 %v439, %v438
    %v446 = vpack.c.bf16 %v441, %v440
    %v447 = vpack.c.bf16 %v443, %v442
    %448 = vst [vmem:[#allocation2 + $0x100] sm:$0xff] %v444
    %449 = vst [vmem:[#allocation2 + $0x108] sm:$0xff] %v445
    %450 = vst [vmem:[#allocation2 + $0x110] sm:$0xff] %v446
    %451 = vst [vmem:[#allocation2 + $0x118] sm:$0xff] %v447
    %v452 = vld [vmem:[#allocation3] sm:$0xff]
    %v453 = vld [vmem:[#allocation3 + $0x8] sm:$0xf]
    %v454 = vld [vmem:[#allocation3 + $0xc] sm:$0xff]
    %v455 = vld [vmem:[#allocation3 + $0x14] sm:$0xf]
    %v456 = vld [vmem:[#allocation3 + $0x18] sm:$0xff]
    %v457 = vld [vmem:[#allocation3 + $0x20] sm:$0xf]
    %v458 = vld [vmem:[#allocation3 + $0x24] sm:$0xff]
    %v459 = vld [vmem:[#allocation3 + $0x2c] sm:$0xf]
    %v460 = vld [vmem:[#allocation3 + $0x30] sm:$0xff]
    %v461 = vld [vmem:[#allocation3 + $0x38] sm:$0xf]
    %v462 = vld [vmem:[#allocation3 + $0x3c] sm:$0xff]
    %v463 = vld [vmem:[#allocation3 + $0x44] sm:$0xf]
    %v464 = vld [vmem:[#allocation3 + $0x48] sm:$0xff]
    %v465 = vld [vmem:[#allocation3 + $0x50] sm:$0xf]
    %v466 = vld [vmem:[#allocation3 + $0x54] sm:$0xff]
    %v467 = vld [vmem:[#allocation3 + $0x5c] sm:$0xf]
    %v468 = vld [vmem:[#allocation2] sm:$0xff]
    %v469 = vld [vmem:[#allocation2 + $0x8] sm:$0xff]
    %v470 = vld [vmem:[#allocation2 + $0x10] sm:$0xff]
    %v471 = vld [vmem:[#allocation2 + $0x18] sm:$0xff]
    %v472 = vld [vmem:[#allocation2 + $0x20] sm:$0xff]
    %v473 = vld [vmem:[#allocation2 + $0x28] sm:$0xff]
    %v474 = vld [vmem:[#allocation2 + $0x30] sm:$0xff]
    %v475 = vld [vmem:[#allocation2 + $0x38] sm:$0xff]
    %v476 = vld [vmem:[#allocation2 + $0x40] sm:$0xff]
    %v477 = vld [vmem:[#allocation2 + $0x48] sm:$0xff]
    %v478 = vld [vmem:[#allocation2 + $0x50] sm:$0xff]
    %v479 = vld [vmem:[#allocation2 + $0x58] sm:$0xff]
    %v480 = vld [vmem:[#allocation2 + $0x60] sm:$0xff]
    %v481 = vld [vmem:[#allocation2 + $0x68] sm:$0xff]
    %v482 = vld [vmem:[#allocation2 + $0x70] sm:$0xff]
    %v483 = vld [vmem:[#allocation2 + $0x78] sm:$0xff]
    %v484 = vld [vmem:[#allocation2 + $0x80] sm:$0xff]
    %v485 = vld [vmem:[#allocation2 + $0x88] sm:$0xff]
    %v486 = vld [vmem:[#allocation2 + $0x90] sm:$0xff]
    %v487 = vld [vmem:[#allocation2 + $0x98] sm:$0xff]
    %v488 = vld [vmem:[#allocation2 + $0xa0] sm:$0xff]
    %v489 = vld [vmem:[#allocation2 + $0xa8] sm:$0xff]
    %v490 = vld [vmem:[#allocation2 + $0xb0] sm:$0xff]
    %v491 = vld [vmem:[#allocation2 + $0xb8] sm:$0xff]
    %v492 = vld [vmem:[#allocation2 + $0xc0] sm:$0xff]
    %v493 = vld [vmem:[#allocation2 + $0xc8] sm:$0xff]
    %v494 = vld [vmem:[#allocation2 + $0xd0] sm:$0xff]
    %v495 = vld [vmem:[#allocation2 + $0xd8] sm:$0xff]
    %v496 = vld [vmem:[#allocation2 + $0xe0] sm:$0xff]
    %v497 = vld [vmem:[#allocation2 + $0xe8] sm:$0xff]
    %v498 = vld [vmem:[#allocation2 + $0xf0] sm:$0xff]
    %v499 = vld [vmem:[#allocation2 + $0xf8] sm:$0xff]
    %v500 = vld [vmem:[#allocation2 + $0x100] sm:$0xff]
    %v501 = vld [vmem:[#allocation2 + $0x108] sm:$0xff]
    %v502 = vld [vmem:[#allocation2 + $0x110] sm:$0xff]
    %v503 = vld [vmem:[#allocation2 + $0x118] sm:$0xff]
    %v504 = vld [vmem:[%s3] sm:$0xff]
    %v505 = vld [vmem:[%s3 + $0x8] sm:$0xff]
    %v506 = vld [vmem:[%s3 + $0x10] sm:$0xff]
    %v507 = vld [vmem:[%s3 + $0x18] sm:$0xff]
    %v508 = vld [vmem:[%s3 + $0x20] sm:$0xff]
    %v509 = vld [vmem:[%s3 + $0x28] sm:$0xff]
    %v510 = vld [vmem:[%s3 + $0x30] sm:$0xff]
    %v511 = vld [vmem:[%s3 + $0x38] sm:$0xff]
    %513 = vset.pattern.permute.xlu0 0
    %514 = vperm.xlu0 %513, %v504
    %v515 = vpop.permute.xlu0 %514
    %518 = vset.pattern.permute.xlu0 0
    %519 = vperm.xlu0 %518, %v505
    %v520 = vpop.permute.xlu0 %519
    %523 = vset.pattern.permute.xlu0 0
    %524 = vperm.xlu0 %523, %v506
    %v525 = vpop.permute.xlu0 %524
    %528 = vset.pattern.permute.xlu0 0
    %529 = vperm.xlu0 %528, %v507
    %v530 = vpop.permute.xlu0 %529
    %533 = vset.pattern.permute.xlu0 0
    %534 = vperm.xlu0 %533, %v508
    %v535 = vpop.permute.xlu0 %534
    %538 = vset.pattern.permute.xlu0 0
    %539 = vperm.xlu0 %538, %v509
    %v540 = vpop.permute.xlu0 %539
    %543 = vset.pattern.permute.xlu0 0
    %544 = vperm.xlu0 %543, %v510
    %v545 = vpop.permute.xlu0 %544
    %548 = vset.pattern.permute.xlu0 0
    %549 = vperm.xlu0 %548, %v511
    %v550 = vpop.permute.xlu0 %549
    %v568 = vunpack.c.l.b16 %v452
    %v569 = vunpack.c.h.b16 %v452
    %v570 = vunpack.c.l.b16 %v453
    %v571 = vunpack.c.l.b16 %v454
    %v572 = vunpack.c.h.b16 %v454
    %v573 = vunpack.c.l.b16 %v455
    %v574 = vunpack.c.l.b16 %v456
    %v575 = vunpack.c.h.b16 %v456
    %v576 = vunpack.c.l.b16 %v457
    %v577 = vunpack.c.l.b16 %v458
    %v578 = vunpack.c.h.b16 %v458
    %v579 = vunpack.c.l.b16 %v459
    %v580 = vunpack.c.l.b16 %v460
    %v581 = vunpack.c.h.b16 %v460
    %v582 = vunpack.c.l.b16 %v461
    %v583 = vunpack.c.l.b16 %v462
    %v584 = vunpack.c.h.b16 %v462
    %v585 = vunpack.c.l.b16 %v463
    %v586 = vunpack.c.l.b16 %v464
    %v587 = vunpack.c.h.b16 %v464
    %v588 = vunpack.c.l.b16 %v465
    %v589 = vunpack.c.l.b16 %v466
    %v590 = vunpack.c.h.b16 %v466
    %v591 = vunpack.c.l.b16 %v467
    %v592 = vpack.c.b16 %v571, %v568
    %v593 = vpack.c.b16 %v572, %v569
    %v594 = vpack.c.b16 %v573, %v570
    %v595 = vpack.c.b16 %v577, %v574
    %v596 = vpack.c.b16 %v578, %v575
    %v597 = vpack.c.b16 %v579, %v576
    %v598 = vpack.c.b16 %v583, %v580
    %v599 = vpack.c.b16 %v584, %v581
    %v600 = vpack.c.b16 %v585, %v582
    %v601 = vpack.c.b16 %v589, %v586
    %v602 = vpack.c.b16 %v590, %v587
    %v603 = vpack.c.b16 %v591, %v588
    %v648 = vunpack.c.l.b16 %v468
    %v649 = vunpack.c.h.b16 %v468
    %v650 = vunpack.c.l.b16 %v469
    %v651 = vunpack.c.h.b16 %v469
    %v652 = vunpack.c.l.b16 %v470
    %v653 = vunpack.c.h.b16 %v470
    %v654 = vunpack.c.l.b16 %v471
    %v655 = vunpack.c.h.b16 %v471
    %v656 = vunpack.c.l.b16 %v472
    %v657 = vunpack.c.h.b16 %v472
    %v658 = vunpack.c.l.b16 %v473
    %v659 = vunpack.c.h.b16 %v473
    %v660 = vunpack.c.l.b16 %v474
    %v661 = vunpack.c.h.b16 %v474
    %v662 = vunpack.c.l.b16 %v475
    %v663 = vunpack.c.h.b16 %v475
    %v664 = vunpack.c.l.b16 %v476
    %v665 = vunpack.c.h.b16 %v476
    %v666 = vunpack.c.l.b16 %v477
    %v667 = vunpack.c.h.b16 %v477
    %v668 = vunpack.c.l.b16 %v478
    %v669 = vunpack.c.h.b16 %v478
    %v670 = vunpack.c.l.b16 %v479
    %v671 = vunpack.c.h.b16 %v479
    %v672 = vunpack.c.l.b16 %v480
    %v673 = vunpack.c.h.b16 %v480
    %v674 = vunpack.c.l.b16 %v481
    %v675 = vunpack.c.h.b16 %v481
    %v676 = vunpack.c.l.b16 %v482
    %v677 = vunpack.c.h.b16 %v482
    %v678 = vunpack.c.l.b16 %v483
    %v679 = vunpack.c.h.b16 %v483
    %v680 = vunpack.c.l.b16 %v484
    %v681 = vunpack.c.h.b16 %v484
    %v682 = vunpack.c.l.b16 %v485
    %v683 = vunpack.c.h.b16 %v485
    %v684 = vunpack.c.l.b16 %v486
    %v685 = vunpack.c.h.b16 %v486
    %v686 = vunpack.c.l.b16 %v487
    %v687 = vunpack.c.h.b16 %v487
    %v688 = vunpack.c.l.b16 %v488
    %v689 = vunpack.c.h.b16 %v488
    %v690 = vunpack.c.l.b16 %v489
    %v691 = vunpack.c.h.b16 %v489
    %v692 = vunpack.c.l.b16 %v490
    %v693 = vunpack.c.h.b16 %v490
    %v694 = vunpack.c.l.b16 %v491
    %v695 = vunpack.c.h.b16 %v491
    %v696 = vunpack.c.l.b16 %v492
    %v697 = vunpack.c.h.b16 %v492
    %v698 = vunpack.c.l.b16 %v493
    %v699 = vunpack.c.h.b16 %v493
    %v700 = vunpack.c.l.b16 %v494
    %v701 = vunpack.c.h.b16 %v494
    %v702 = vunpack.c.l.b16 %v495
    %v703 = vunpack.c.h.b16 %v495
    %v704 = vunpack.c.l.b16 %v496
    %v705 = vunpack.c.h.b16 %v496
    %v706 = vunpack.c.l.b16 %v497
    %v707 = vunpack.c.h.b16 %v497
    %v708 = vunpack.c.l.b16 %v498
    %v709 = vunpack.c.h.b16 %v498
    %v710 = vunpack.c.l.b16 %v499
    %v711 = vunpack.c.h.b16 %v499
    %v712 = vunpack.c.l.b16 %v500
    %v713 = vunpack.c.h.b16 %v500
    %v714 = vunpack.c.l.b16 %v501
    %v715 = vunpack.c.h.b16 %v501
    %v716 = vunpack.c.l.b16 %v502
    %v717 = vunpack.c.h.b16 %v502
    %v718 = vunpack.c.l.b16 %v503
    %v719 = vunpack.c.h.b16 %v503
    %v720 = vpack.c.b16 %v650, %v648
    %v721 = vpack.c.b16 %v651, %v649
    %v722 = vpack.c.b16 %v654, %v652
    %v723 = vpack.c.b16 %v655, %v653
    %v724 = vpack.c.b16 %v658, %v656
    %v725 = vpack.c.b16 %v659, %v657
    %v726 = vpack.c.b16 %v662, %v660
    %v727 = vpack.c.b16 %v663, %v661
    %v728 = vpack.c.b16 %v666, %v664
    %v729 = vpack.c.b16 %v667, %v665
    %v730 = vpack.c.b16 %v670, %v668
    %v731 = vpack.c.b16 %v671, %v669
    %v732 = vpack.c.b16 %v674, %v672
    %v733 = vpack.c.b16 %v675, %v673
    %v734 = vpack.c.b16 %v678, %v676
    %v735 = vpack.c.b16 %v679, %v677
    %v736 = vpack.c.b16 %v682, %v680
    %v737 = vpack.c.b16 %v683, %v681
    %v738 = vpack.c.b16 %v686, %v684
    %v739 = vpack.c.b16 %v687, %v685
    %v740 = vpack.c.b16 %v690, %v688
    %v741 = vpack.c.b16 %v691, %v689
    %v742 = vpack.c.b16 %v694, %v692
    %v743 = vpack.c.b16 %v695, %v693
    %v744 = vpack.c.b16 %v698, %v696
    %v745 = vpack.c.b16 %v699, %v697
    %v746 = vpack.c.b16 %v702, %v700
    %v747 = vpack.c.b16 %v703, %v701
    %v748 = vpack.c.b16 %v706, %v704
    %v749 = vpack.c.b16 %v707, %v705
    %v750 = vpack.c.b16 %v710, %v708
    %v751 = vpack.c.b16 %v711, %v709
    %v752 = vpack.c.b16 %v714, %v712
    %v753 = vpack.c.b16 %v715, %v713
    %v754 = vpack.c.b16 %v718, %v716
    %v755 = vpack.c.b16 %v719, %v717
    %vm792 = vcmask 261120
    %v794 = vsel %vm792, %v594, 0
    %v797 = vsel %vm792, %v597, 0
    %v800 = vsel %vm792, %v600, 0
    %v803 = vsel %vm792, %v603, 0
    %805 = vmatpush.bf16.msra.mxu0 %v734
    %806 = vmatpush.bf16.msra.mxu0 %v732
    %807 = vmatpush.bf16.msra.mxu0 %v730
    %808 = vmatpush.bf16.msra.mxu0 %v728
    %809 = vmatpush.bf16.msra.mxu0 %v726
    %810 = vmatpush.bf16.msra.mxu0 %v724
    %811 = vmatpush.bf16.msra.mxu0 %v722
    %812 = vmatpush.bf16.msra.mxu0 %v720
    %813 = vmatmul.bf16.gmra.mxu0 %v592
    %v814 = vpop.f32.mrf.mxu0
    %v815 = vadd.f32 %v515, %v814
    %v816 = vpop.f32.mrf.mxu0
    %v817 = vadd.f32 %v520, %v816
    %818 = vmatmul.bf16.gmra.mxu0 %v595
    %v819 = vpop.f32.mrf.mxu0
    %v820 = vadd.f32 %v525, %v819
    %v821 = vpop.f32.mrf.mxu0
    %v822 = vadd.f32 %v530, %v821
    %823 = vmatmul.bf16.gmra.mxu0 %v598
    %v824 = vpop.f32.mrf.mxu0
    %v825 = vadd.f32 %v535, %v824
    %v826 = vpop.f32.mrf.mxu0
    %v827 = vadd.f32 %v540, %v826
    %828 = vmatmul.bf16.gmra.mxu0 %v601
    %v829 = vpop.f32.mrf.mxu0
    %v830 = vadd.f32 %v545, %v829
    %v831 = vpop.f32.mrf.mxu0
    %v832 = vadd.f32 %v550, %v831
    %833 = vdwg.mxu0
    %834 = vmatpush.bf16.msra.mxu0 %v750
    %835 = vmatpush.bf16.msra.mxu0 %v748
    %836 = vmatpush.bf16.msra.mxu0 %v746
    %837 = vmatpush.bf16.msra.mxu0 %v744
    %838 = vmatpush.bf16.msra.mxu0 %v742
    %839 = vmatpush.bf16.msra.mxu0 %v740
    %840 = vmatpush.bf16.msra.mxu0 %v738
    %841 = vmatpush.bf16.msra.mxu0 %v736
    %842 = vmatmul.bf16.gmra.mxu0 %v593
    %v843 = vpop.f32.mrf.mxu0
    %v844 = vadd.f32 %v815, %v843
    %v845 = vpop.f32.mrf.mxu0
    %v846 = vadd.f32 %v817, %v845
    %847 = vmatmul.bf16.gmra.mxu0 %v596
    %v848 = vpop.f32.mrf.mxu0
    %v849 = vadd.f32 %v820, %v848
    %v850 = vpop.f32.mrf.mxu0
    %v851 = vadd.f32 %v822, %v850
    %852 = vmatmul.bf16.gmra.mxu0 %v599
    %v853 = vpop.f32.mrf.mxu0
    %v854 = vadd.f32 %v825, %v853
    %v855 = vpop.f32.mrf.mxu0
    %v856 = vadd.f32 %v827, %v855
    %857 = vmatmul.bf16.gmra.mxu0 %v602
    %v858 = vpop.f32.mrf.mxu0
    %v859 = vadd.f32 %v830, %v858
    %v860 = vpop.f32.mrf.mxu0
    %v861 = vadd.f32 %v832, %v860
    %862 = vdwg.mxu0
    %863 = vmatpush.bf16.msra.mxu0 0
    %864 = vmatpush.bf16.msra.mxu0 0
    %865 = vmatpush.bf16.msra.mxu0 0
    %866 = vmatpush.bf16.msra.mxu0 0
    %867 = vmatpush.bf16.msra.mxu0 0
    %868 = vmatpush.bf16.msra.mxu0 0
    %869 = vmatpush.bf16.msra.mxu0 %v754
    %870 = vmatpush.bf16.msra.mxu0 %v752
    %871 = vmatmul.bf16.gmra.mxu0 %v794
    %v872 = vpop.f32.mrf.mxu0
    %v873 = vadd.f32 %v844, %v872
    %v874 = vpop.f32.mrf.mxu0
    %v875 = vadd.f32 %v846, %v874
    %876 = vmatmul.bf16.gmra.mxu0 %v797
    %v877 = vpop.f32.mrf.mxu0
    %v878 = vadd.f32 %v849, %v877
    %v879 = vpop.f32.mrf.mxu0
    %v880 = vadd.f32 %v851, %v879
    %881 = vmatmul.bf16.gmra.mxu0 %v800
    %v882 = vpop.f32.mrf.mxu0
    %v883 = vadd.f32 %v854, %v882
    %v884 = vpop.f32.mrf.mxu0
    %v885 = vadd.f32 %v856, %v884
    %886 = vmatmul.bf16.gmra.mxu0 %v803
    %v887 = vpop.f32.mrf.mxu0
    %v888 = vadd.f32 %v859, %v887
    %v889 = vpop.f32.mrf.mxu0
    %v890 = vadd.f32 %v861, %v889
    %891 = vdwg.mxu0
    %892 = vmatpush.bf16.msra.mxu0 %v735
    %893 = vmatpush.bf16.msra.mxu0 %v733
    %894 = vmatpush.bf16.msra.mxu0 %v731
    %895 = vmatpush.bf16.msra.mxu0 %v729
    %896 = vmatpush.bf16.msra.mxu0 %v727
    %897 = vmatpush.bf16.msra.mxu0 %v725
    %898 = vmatpush.bf16.msra.mxu0 %v723
    %899 = vmatpush.bf16.msra.mxu0 %v721
    %900 = vmatmul.bf16.gmra.mxu0 %v592
    %v901 = vpop.f32.mrf.mxu0
    %v902 = vadd.f32 %v515, %v901
    %v903 = vpop.f32.mrf.mxu0
    %v904 = vadd.f32 %v520, %v903
    %905 = vmatmul.bf16.gmra.mxu0 %v595
    %v906 = vpop.f32.mrf.mxu0
    %v907 = vadd.f32 %v525, %v906
    %v908 = vpop.f32.mrf.mxu0
    %v909 = vadd.f32 %v530, %v908
    %910 = vmatmul.bf16.gmra.mxu0 %v598
    %v911 = vpop.f32.mrf.mxu0
    %v912 = vadd.f32 %v535, %v911
    %v913 = vpop.f32.mrf.mxu0
    %v914 = vadd.f32 %v540, %v913
    %915 = vmatmul.bf16.gmra.mxu0 %v601
    %v916 = vpop.f32.mrf.mxu0
    %v917 = vadd.f32 %v545, %v916
    %v918 = vpop.f32.mrf.mxu0
    %v919 = vadd.f32 %v550, %v918
    %920 = vdwg.mxu0
    %921 = vmatpush.bf16.msra.mxu0 %v751
    %922 = vmatpush.bf16.msra.mxu0 %v749
    %923 = vmatpush.bf16.msra.mxu0 %v747
    %924 = vmatpush.bf16.msra.mxu0 %v745
    %925 = vmatpush.bf16.msra.mxu0 %v743
    %926 = vmatpush.bf16.msra.mxu0 %v741
    %927 = vmatpush.bf16.msra.mxu0 %v739
    %928 = vmatpush.bf16.msra.mxu0 %v737
    %929 = vmatmul.bf16.gmra.mxu0 %v593
    %v930 = vpop.f32.mrf.mxu0
    %v931 = vadd.f32 %v902, %v930
    %v932 = vpop.f32.mrf.mxu0
    %v933 = vadd.f32 %v904, %v932
    %934 = vmatmul.bf16.gmra.mxu0 %v596
    %v935 = vpop.f32.mrf.mxu0
    %v936 = vadd.f32 %v907, %v935
    %v937 = vpop.f32.mrf.mxu0
    %v938 = vadd.f32 %v909, %v937
    %939 = vmatmul.bf16.gmra.mxu0 %v599
    %v940 = vpop.f32.mrf.mxu0
    %v941 = vadd.f32 %v912, %v940
    %v942 = vpop.f32.mrf.mxu0
    %v943 = vadd.f32 %v914, %v942
    %944 = vmatmul.bf16.gmra.mxu0 %v602
    %v945 = vpop.f32.mrf.mxu0
    %v946 = vadd.f32 %v917, %v945
    %v947 = vpop.f32.mrf.mxu0
    %v948 = vadd.f32 %v919, %v947
    %949 = vdwg.mxu0
    %950 = vmatpush.bf16.msra.mxu0 0
    %951 = vmatpush.bf16.msra.mxu0 0
    %952 = vmatpush.bf16.msra.mxu0 0
    %953 = vmatpush.bf16.msra.mxu0 0
    %954 = vmatpush.bf16.msra.mxu0 0
    %955 = vmatpush.bf16.msra.mxu0 0
    %956 = vmatpush.bf16.msra.mxu0 %v755
    %957 = vmatpush.bf16.msra.mxu0 %v753
    %958 = vmatmul.bf16.gmra.mxu0 %v794
    %v959 = vpop.f32.mrf.mxu0
    %v960 = vadd.f32 %v931, %v959
    %v961 = vpop.f32.mrf.mxu0
    %v962 = vadd.f32 %v933, %v961
    %963 = vmatmul.bf16.gmra.mxu0 %v797
    %v964 = vpop.f32.mrf.mxu0
    %v965 = vadd.f32 %v936, %v964
    %v966 = vpop.f32.mrf.mxu0
    %v967 = vadd.f32 %v938, %v966
    %968 = vmatmul.bf16.gmra.mxu0 %v800
    %v969 = vpop.f32.mrf.mxu0
    %v970 = vadd.f32 %v941, %v969
    %v971 = vpop.f32.mrf.mxu0
    %v972 = vadd.f32 %v943, %v971
    %973 = vmatmul.bf16.gmra.mxu0 %v803
    %v974 = vpop.f32.mrf.mxu0
    %v975 = vadd.f32 %v946, %v974
    %v976 = vpop.f32.mrf.mxu0
    %v977 = vadd.f32 %v948, %v976
    %978 = vdwg.mxu0
    %979 = vst [vmem:[#allocation8] sm:$0xff] %v873
    %980 = vst [vmem:[#allocation8 + $0x8] sm:$0xff] %v960
    %981 = vst [vmem:[#allocation8 + $0x10] sm:$0xff] %v875
    %982 = vst [vmem:[#allocation8 + $0x18] sm:$0xff] %v962
    %983 = vst [vmem:[#allocation8 + $0x20] sm:$0xff] %v878
    %984 = vst [vmem:[#allocation8 + $0x28] sm:$0xff] %v965
    %985 = vst [vmem:[#allocation8 + $0x30] sm:$0xff] %v880
    %986 = vst [vmem:[#allocation8 + $0x38] sm:$0xff] %v967
    %987 = vst [vmem:[#allocation8 + $0x40] sm:$0xff] %v883
    %988 = vst [vmem:[#allocation8 + $0x48] sm:$0xff] %v970
    %989 = vst [vmem:[#allocation8 + $0x50] sm:$0xff] %v885
    %990 = vst [vmem:[#allocation8 + $0x58] sm:$0xff] %v972
    %991 = vst [vmem:[#allocation8 + $0x60] sm:$0xff] %v888
    %992 = vst [vmem:[#allocation8 + $0x68] sm:$0xff] %v975
    %993 = vst [vmem:[#allocation8 + $0x70] sm:$0xff] %v890
    %994 = vst [vmem:[#allocation8 + $0x78] sm:$0xff] %v977
    // Predicated region
    $region26: #{tpu_custom_call.1} parent=1 // pred_check
      _
    $region27: #{tpu_custom_call.1} parent=1 // pred_check_branch
      %996 = sbr.rel (0) target = $region29
    $region28: #{tpu_custom_call.1} parent=1 // pred_region
      %998 = vsyncadd [#allocation5], 0
      %s999 = sshll.u32 [#allocation8], 4
      %s1000 = int_to_ptr.vmem [resolvable:$true] %s999
      %s1001 = sshll.u32 %s4, 4
      %s1002 = int_to_ptr.hbm [resolvable:$true] %s1001
      %1007 = dma.vmem_to_hbm [thread:$0]  %s1000, 2048, %s1002, [#allocation5], 256, 256, 16
    $region29: #{tpu_custom_call.1} parent=1 // pred_fallthru
      _
    // Predicated region
    $region30: #{tpu_custom_call.1} parent=1 // pred_check
      _
    $region31: #{tpu_custom_call.1} parent=1 // pred_check_branch
      %1009 = sbr.rel (0) target = $region33
    $region32: #{tpu_custom_call.1} parent=1 // pred_region
      %1011 = dma.done [#allocation5], 2048
    $region33: #{tpu_custom_call.1} parent=1 // pred_fallthru
      _
    %1012 = vsyncpa [#allocation4], 1
    %1013 = vsyncpa [#allocation7], 1
    %1014 = vsyncpa [#allocation5], 1

</llo_original>
